<compile_context>
chip_gen: v7x
topology: tpu7x:2x2x1
jax: 0.10.0
libtpu: 0.0.40
codegen_flags: <defaults>
</compile_context>

<pallas_src>
import numpy as np
import jax
import jax.numpy as jnp
from jax.experimental import pallas as pl
from jax.experimental.pallas import tpu as pltpu

VOCAB = 16
EMB_DIM = 32
ENC_DIM = 32
BATCH = 2


# ------------------------------ Pallas kernel ------------------------------

def _tree_kernel(depth_ref,   # SMEM scalar-prefetch (L,) int32: depth == slot id
                 ids_ref,     # VMEM (L, S, 1) int32: node ids, -1 padded
                 prow_ref,    # VMEM (L, 1, S) int32: row in parent call, -1 pad/root
                 brow_ref,    # VMEM (L, 1, S) int32: batch row, -1 padded
                 table_ref,   # VMEM (VOCAB+1, ENC) f32: [emb @ W_c ; bias]
                 out_ref,     # VMEM (BATCH, ENC) f32: running max (resident)
                 bufs_ref):   # VMEM scratch (DEPTH, S, ENC) f32: recycled slots
    L, S, _ = ids_ref.shape
    vocab_p1 = table_ref.shape[0]
    batch = out_ref.shape[0]

    # One-time init: depth-bounded slot pool (O(depth), not O(L)) + running max.
    bufs_ref[...] = jnp.zeros(bufs_ref.shape, bufs_ref.dtype)
    out_ref[...] = jnp.full(out_ref.shape, -jnp.inf, out_ref.dtype)

    # Loop-invariants hoisted out of the per-call loop.
    iota_v = jax.lax.broadcasted_iota(jnp.int32, (S, vocab_p1), 1)
    iota_p = jax.lax.broadcasted_iota(jnp.int32, (S, S), 0)
    iota_b = jax.lax.broadcasted_iota(jnp.int32, (batch, S), 0)
    table = table_ref[...]

    @pl.loop(0, L)
    def _(l):
        ids = ids_ref[l]                                   # (S, 1)
        prow = prow_ref[l]                                 # (1, S)
        brow = brow_ref[l]                                 # (1, S)
        d = depth_ref[l]                                   # scalar slot id (depth)

        # Fused embedding gather + W_c + bias: one-hot column VOCAB is the
        # row-valid flag, table row VOCAB holds the bias (no relu, as in ref).
        valid = ids >= 0
        onehot = jnp.logical_or(
            iota_v == ids,
            jnp.logical_and(iota_v == vocab_p1 - 1, valid)).astype(jnp.float32)

        acc = bufs_ref[d]                                  # children already summed
        bufs_ref[d] = jnp.zeros_like(acc)                  # free slot for reuse
        cur = acc + jnp.dot(onehot, table, preferred_element_type=jnp.float32)

        # Scatter-add this finished call into its parent's slot (depth d-1);
        # post-order guarantees the parent step comes later.  Root: skip the
        # dead scatter entirely.
        @pl.when(d > 0)
        def _scatter():
            p_onehot = (iota_p == prow).astype(jnp.float32)  # [i, r] = prow[r]==i
            bufs_ref[d - 1] = bufs_ref[d - 1] + jnp.dot(
                p_onehot, cur, preferred_element_type=jnp.float32)

        # node_list entry for this call, folded into the running max.
        b_onehot = (iota_b == brow).astype(jnp.float32)      # [b, r] = brow[r]==b
        entry = jnp.dot(b_onehot, cur, preferred_element_type=jnp.float32)
        out_ref[...] = jnp.maximum(out_ref[...], entry)


def _build_encoder_call(L, S, D, batch, vocab, enc_dim):
    grid_spec = pltpu.PrefetchScalarGridSpec(
        num_scalar_prefetch=1,                              # depth/slot ids -> SMEM
        grid=(1,),                                          # single step; loop in-kernel
        in_specs=[
            pl.BlockSpec((L, S, 1), lambda i, d: (0, 0, 0)),        # node ids
            pl.BlockSpec((L, 1, S), lambda i, d: (0, 0, 0)),        # parent rows
            pl.BlockSpec((L, 1, S), lambda i, d: (0, 0, 0)),        # batch rows
            pl.BlockSpec((vocab + 1, enc_dim), lambda i, d: (0, 0)),  # fused table
        ],
        out_specs=pl.BlockSpec((batch, enc_dim), lambda i, d: (0, 0)),
        scratch_shapes=[pltpu.VMEM((D, S, enc_dim), jnp.float32)],
    )
    fn = pl.pallas_call(
        _tree_kernel,
        out_shape=jax.ShapeDtypeStruct((batch, enc_dim), jnp.float32),
        grid_spec=grid_spec,
        compiler_params=pltpu.CompilerParams(
            dimension_semantics=("arbitrary",)),
    )
    return jax.jit(fn)


# --------------------------- host-side scheduling ---------------------------
# TODO(synk): the recursive, data-dependent tree walk has no Pallas equivalent;
# it is flattened host-side (pure index bookkeeping, no math) into a static
# post-order schedule (one record per traverse_mul call) that drives ONE
# Pallas kernel invocation.

class BatchTreeEncoderPallas:
    def __init__(self, vocab_size, embedding_dim, encode_dim, key):
        k1, k2, k3 = jax.random.split(key, 3)
        self.emb = 0.1 * jax.random.normal(k1, (vocab_size, embedding_dim),
                                           jnp.float32)
        self.w = 0.1 * jax.random.normal(k2, (embedding_dim, encode_dim),
                                         jnp.float32)
        self.b = 0.1 * jax.random.normal(k3, (encode_dim,), jnp.float32)
        self.vocab_size = vocab_size
        self.encode_dim = encode_dim
        # emb[i] @ W == (emb @ W)[i] exactly (pure row selection), so fuse once
        # and append the bias as the last row of the table.
        fused = jnp.dot(self.emb, self.w, precision=jax.lax.Precision.HIGHEST)
        self.table = jnp.concatenate([fused, self.b.reshape(1, encode_dim)],
                                     axis=0)
        self._compiled = {}

    def _schedule(self, x, bs):
        calls = []

        def rec(node, batch_index, depth):
            size = len(node)
            if not size:
                return None
            current_node, children_index, children = [], [], []
            for i in range(size):
                current_node.append(node[i][0])
                temp = node[i][1:]
                for j in range(len(temp)):
                    if temp[j][0] != -1:
                        if len(children_index) <= j:
                            children_index.append([i])
                            children.append([temp[j]])
                        else:
                            children_index[j].append(i)
                            children[j].append(temp[j])
            child_recs = []
            for c in range(len(children)):
                cid = rec(children[c],
                          [batch_index[i] for i in children_index[c]], depth + 1)
                if cid is not None:
                    child_recs.append((cid, children_index[c]))
            my_id = len(calls)
            calls.append(dict(ids=current_node, brows=list(batch_index),
                              prows=[-1] * size, depth=depth))
            for cid, rows in child_recs:
                calls[cid]['prows'] = list(rows)
            return my_id

        rec(x, list(range(bs)), 0)
        L = len(calls)
        max_sz = max(len(c['ids']) for c in calls)
        S = max(8, -(-max_sz // 8) * 8)                   # pad to sublane multiple
        D = max(c['depth'] for c in calls) + 1            # depth-bounded slot pool

        ids = np.full((L, S, 1), -1, np.int32)
        prows = np.full((L, 1, S), -1, np.int32)
        brows = np.full((L, 1, S), -1, np.int32)
        depth = np.zeros((L,), np.int32)
        for k, c in enumerate(calls):
            n = len(c['ids'])
            ids[k, :n, 0] = c['ids']
            prows[k, 0, :n] = c['prows']
            brows[k, 0, :n] = c['brows']
            depth[k] = c['depth']
        return (L, S, D, jnp.asarray(ids), jnp.asarray(prows),
                jnp.asarray(brows), jnp.asarray(depth))

    def forward(self, x, bs):
        L, S, D, ids, prows, brows, depth = self._schedule(x, bs)
        key = (L, S, D, bs)
        if key not in self._compiled:
            self._compiled[key] = _build_encoder_call(
                L, S, D, bs, self.vocab_size, self.encode_dim)
        return self._compiled[key](depth, ids, prows, brows, self.table)


# --------------------------------- reference --------------------------------

def reference_forward(x, bs, emb, w, b, encode_dim):
    emb = np.asarray(emb)
    w = np.asarray(w)
    b = np.asarray(b)
    node_list = []

    def traverse(node, batch_index):
        size = len(node)
        if not size:
            return None
        current_node = []
        children_index, children = [], []
        for i in range(size):
            current_node.append(node[i][0])
            temp = node[i][1:]
            for j in range(len(temp)):
                if temp[j][0] != -1:
                    if len(children_index) <= j:
                        children_index.append([i])
                        children.append([temp[j]])
                    else:
                        children_index[j].append(i)
                        children[j].append(temp[j])
        batch_current = emb[np.asarray(current_node)] @ w + b
        for c in range(len(children)):
            tree = traverse(children[c],
                            [batch_index[i] for i in children_index[c]])
            if tree is not None:
                add = np.zeros_like(batch_current)
                add[np.asarray(children_index[c])] = tree
                batch_current = batch_current + add
        bn = np.zeros((bs, encode_dim), np.float32)
        bn[np.asarray(batch_index)] = batch_current
        node_list.append(bn)
        return batch_current

    traverse(x, list(range(bs)))
    return np.max(np.stack(node_list), axis=0)


# ----------------------------------- main ------------------------------------

if __name__ == "__main__":
    key = jax.random.PRNGKey(0)
    enc = BatchTreeEncoderPallas(VOCAB, EMB_DIM, ENC_DIM, key)

    # x: list of BATCH trees; each node is [token_id, child, child, ...];
    # a child whose id is -1 is a "stop" marker and is skipped.
    tree0 = [3, [5, [7], [-1]], [2]]
    tree1 = [1, [4, [-1]], [6, [2], [9]]]
    x = [tree0, tree1]

    out = enc.forward(x, BATCH)
    out = jax.block_until_ready(out)

    ref = reference_forward(x, BATCH, enc.emb, enc.w, enc.b, ENC_DIM)
    assert out.shape == (BATCH, ENC_DIM)
    assert np.allclose(np.asarray(out), ref, atol=1e-5, rtol=1e-5)

    print("KERNEL_OK")
</pallas_src>

<mosaic_0001>
module attributes {stable_mosaic.version = 11 : i64} {
  func.func @_tree_kernel(%arg0: i32, %arg1: memref<6xi32, #tpu.memory_space<smem>>, %arg2: memref<6x8x1xi32, #tpu.memory_space<vmem>>, %arg3: memref<6x1x8xi32, #tpu.memory_space<vmem>>, %arg4: memref<6x1x8xi32, #tpu.memory_space<vmem>>, %arg5: memref<17x32xf32, #tpu.memory_space<vmem>>, %arg6: memref<2x32xf32, #tpu.memory_space<vmem>>, %arg7: memref<3x8x32xf32, #tpu.memory_space<vmem>>) attributes {dimension_semantics = [#tpu.dimension_semantics<arbitrary>], iteration_bounds = array<i64: 1>, scalar_prefetch = 1 : i64, scratch_operands = 1 : i64, tpu.core_type = #tpu.core_type<tc>, window_params = [{pipeline_mode = #tpu.pipeline_mode<synchronous>, transform_indices = @transform_0, window_bounds = array<i64: 6, 8, 1>}, {pipeline_mode = #tpu.pipeline_mode<synchronous>, transform_indices = @transform_1, window_bounds = array<i64: 6, 1, 8>}, {pipeline_mode = #tpu.pipeline_mode<synchronous>, transform_indices = @transform_2, window_bounds = array<i64: 6, 1, 8>}, {pipeline_mode = #tpu.pipeline_mode<synchronous>, transform_indices = @transform_3, window_bounds = array<i64: 17, 32>}, {pipeline_mode = #tpu.pipeline_mode<synchronous>, transform_indices = @transform_4, window_bounds = array<i64: 2, 32>}]} {
    %cst = arith.constant 0.000000e+00 : f32
    %0 = vector.broadcast %cst : f32 to vector<3x8x32xf32>
    %c0 = arith.constant 0 : index
    %c0_0 = arith.constant 0 : index
    %c0_1 = arith.constant 0 : index
    %1 = vector.load %arg7[%c0, %c0_0, %c0_1] : memref<3x8x32xf32, #tpu.memory_space<vmem>>, vector<3x8x32xf32>
    tpu.vector_store %arg7[%c0, %c0_0, %c0_1], %0 {strides = array<i32>} : memref<3x8x32xf32, #tpu.memory_space<vmem>>, vector<3x8x32xf32>,
    %cst_2 = arith.constant 0xFF800000 : f32
    %2 = vector.broadcast %cst_2 : f32 to vector<2x32xf32>
    %c0_3 = arith.constant 0 : index
    %c0_4 = arith.constant 0 : index
    %3 = vector.load %arg6[%c0_3, %c0_4] : memref<2x32xf32, #tpu.memory_space<vmem>>, vector<2x32xf32>
    tpu.vector_store %arg6[%c0_3, %c0_4], %2 {strides = array<i32>} : memref<2x32xf32, #tpu.memory_space<vmem>>, vector<2x32xf32>,
    %4 = tpu.iota {dimensions = array<i32: 1>} : vector<8x17xi32>
    %5 = tpu.iota {dimensions = array<i32: 0>} : vector<8x8xi32>
    %6 = tpu.iota {dimensions = array<i32: 0>} : vector<2x8xi32>
    %c0_5 = arith.constant 0 : index
    %c0_6 = arith.constant 0 : index
    %7 = vector.load %arg5[%c0_5, %c0_6] : memref<17x32xf32, #tpu.memory_space<vmem>>, vector<17x32xf32>
    %c0_i32 = arith.constant 0 : i32
    %c6_i32 = arith.constant 6 : i32
    %8 = arith.addi %c0_i32, %c6_i32 : i32
    %c1_i32 = arith.constant 1 : i32
    scf.for %arg8 = %c0_i32 to %8 step %c1_i32  : i32 {
      %c1_i32_8 = arith.constant 1 : i32
      %9 = arith.muli %arg8, %c1_i32_8 : i32
      %c0_i32_9 = arith.constant 0 : i32
      %10 = arith.addi %c0_i32_9, %9 : i32
      %11 = arith.index_cast %10 : i32 to index
      %c0_10 = arith.constant 0 : index
      %c0_11 = arith.constant 0 : index
      %12 = vector.load %arg2[%11, %c0_10, %c0_11] : memref<6x8x1xi32, #tpu.memory_space<vmem>>, vector<1x8x1xi32>
      %13 = vector.shape_cast %12 : vector<1x8x1xi32> to vector<8x1xi32>
      %14 = arith.index_cast %10 : i32 to index
      %c0_12 = arith.constant 0 : index
      %c0_13 = arith.constant 0 : index
      %15 = vector.load %arg3[%14, %c0_12, %c0_13] : memref<6x1x8xi32, #tpu.memory_space<vmem>>, vector<1x1x8xi32>
      %16 = vector.shape_cast %15 : vector<1x1x8xi32> to vector<1x8xi32>
      %17 = arith.index_cast %10 : i32 to index
      %c0_14 = arith.constant 0 : index
      %c0_15 = arith.constant 0 : index
      %18 = vector.load %arg4[%17, %c0_14, %c0_15] : memref<6x1x8xi32, #tpu.memory_space<vmem>>, vector<1x1x8xi32>
      %19 = vector.shape_cast %18 : vector<1x1x8xi32> to vector<1x8xi32>
      %20 = arith.index_cast %10 : i32 to index
      %21 = memref.load %arg1[%20] : memref<6xi32, #tpu.memory_space<smem>>
      %c0_i32_16 = arith.constant 0 : i32
      %22 = vector.broadcast %c0_i32_16 : i32 to vector<8x1xi32>
      %23 = arith.cmpi sge, %13, %22 : vector<8x1xi32>
      %24 = vector.broadcast %13 : vector<8x1xi32> to vector<8x17xi32>
      %25 = arith.cmpi eq, %4, %24 : vector<8x17xi32>
      %c16_i32 = arith.constant 16 : i32
      %26 = vector.broadcast %c16_i32 : i32 to vector<8x17xi32>
      %27 = arith.cmpi eq, %4, %26 : vector<8x17xi32>
      %28 = vector.broadcast %23 : vector<8x1xi1> to vector<8x17xi1>
      %29 = arith.andi %27, %28 : vector<8x17xi1>
      %30 = arith.ori %25, %29 : vector<8x17xi1>
      %31 = arith.extui %30 : vector<8x17xi1> to vector<8x17xi32>
      %32 = arith.sitofp %31 : vector<8x17xi32> to vector<8x17xf32>
      %33 = arith.index_cast %21 : i32 to index
      %c0_17 = arith.constant 0 : index
      %c0_18 = arith.constant 0 : index
      %34 = vector.load %arg7[%33, %c0_17, %c0_18] : memref<3x8x32xf32, #tpu.memory_space<vmem>>, vector<1x8x32xf32>
      %35 = vector.shape_cast %34 : vector<1x8x32xf32> to vector<8x32xf32>
      %cst_19 = arith.constant 0.000000e+00 : f32
      %36 = vector.broadcast %cst_19 : f32 to vector<8x32xf32>
      %37 = arith.index_cast %21 : i32 to index
      %c0_20 = arith.constant 0 : index
      %c0_21 = arith.constant 0 : index
      %38 = vector.load %arg7[%37, %c0_20, %c0_21] : memref<3x8x32xf32, #tpu.memory_space<vmem>>, vector<1x8x32xf32>
      %39 = vector.shape_cast %38 : vector<1x8x32xf32> to vector<8x32xf32>
      %40 = vector.shape_cast %36 : vector<8x32xf32> to vector<1x8x32xf32>
      tpu.vector_store %arg7[%37, %c0_20, %c0_21], %40 {strides = array<i32>} : memref<3x8x32xf32, #tpu.memory_space<vmem>>, vector<1x8x32xf32>,
      %cst_22 = arith.constant dense<0.000000e+00> : vector<8x32xf32>
      %41 = tpu.matmul %32, %7, %cst_22 {dimension_numbers = #tpu.dot_dimension_numbers<[1], [0], [0], [1], [0, 0, 1, 1], [], []>} : vector<8x17xf32>, vector<17x32xf32>, vector<8x32xf32> -> vector<8x32xf32>
      %42 = arith.addf %35, %41 : vector<8x32xf32>
      %c0_i32_23 = arith.constant 0 : i32
      %43 = arith.cmpi sgt, %21, %c0_i32_23 : i32
      %44 = arith.extui %43 : i1 to i32
      %c0_i32_24 = arith.constant 0 : i32
      %45 = arith.cmpi ne, %44, %c0_i32_24 : i32
      scf.if %45 {
        %54 = vector.broadcast %16 : vector<1x8xi32> to vector<8x8xi32>
        %55 = arith.cmpi eq, %5, %54 : vector<8x8xi32>
        %56 = arith.extui %55 : vector<8x8xi1> to vector<8x8xi32>
        %57 = arith.sitofp %56 : vector<8x8xi32> to vector<8x8xf32>
        %c1_i32_30 = arith.constant 1 : i32
        %58 = arith.subi %21, %c1_i32_30 : i32
        %59 = arith.index_cast %58 : i32 to index
        %c0_31 = arith.constant 0 : index
        %c0_32 = arith.constant 0 : index
        %60 = vector.load %arg7[%59, %c0_31, %c0_32] : memref<3x8x32xf32, #tpu.memory_space<vmem>>, vector<1x8x32xf32>
        %61 = vector.shape_cast %60 : vector<1x8x32xf32> to vector<8x32xf32>
        %cst_33 = arith.constant dense<0.000000e+00> : vector<8x32xf32>
        %62 = tpu.matmul %57, %42, %cst_33 {dimension_numbers = #tpu.dot_dimension_numbers<[1], [0], [0], [1], [0, 0, 1, 1], [], []>} : vector<8x8xf32>, vector<8x32xf32>, vector<8x32xf32> -> vector<8x32xf32>
        %63 = arith.addf %61, %62 : vector<8x32xf32>
        %c1_i32_34 = arith.constant 1 : i32
        %64 = arith.subi %21, %c1_i32_34 : i32
        %65 = arith.index_cast %64 : i32 to index
        %c0_35 = arith.constant 0 : index
        %c0_36 = arith.constant 0 : index
        %66 = vector.load %arg7[%65, %c0_35, %c0_36] : memref<3x8x32xf32, #tpu.memory_space<vmem>>, vector<1x8x32xf32>
        %67 = vector.shape_cast %66 : vector<1x8x32xf32> to vector<8x32xf32>
        %68 = vector.shape_cast %63 : vector<8x32xf32> to vector<1x8x32xf32>
        tpu.vector_store %arg7[%65, %c0_35, %c0_36], %68 {strides = array<i32>} : memref<3x8x32xf32, #tpu.memory_space<vmem>>, vector<1x8x32xf32>,
      } else {
      }
      %46 = vector.broadcast %19 : vector<1x8xi32> to vector<2x8xi32>
      %47 = arith.cmpi eq, %6, %46 : vector<2x8xi32>
      %48 = arith.extui %47 : vector<2x8xi1> to vector<2x8xi32>
      %49 = arith.sitofp %48 : vector<2x8xi32> to vector<2x8xf32>
      %cst_25 = arith.constant dense<0.000000e+00> : vector<2x32xf32>
      %50 = tpu.matmul %49, %42, %cst_25 {dimension_numbers = #tpu.dot_dimension_numbers<[1], [0], [0], [1], [0, 0, 1, 1], [], []>} : vector<2x8xf32>, vector<8x32xf32>, vector<2x32xf32> -> vector<2x32xf32>
      %c0_26 = arith.constant 0 : index
      %c0_27 = arith.constant 0 : index
      %51 = vector.load %arg6[%c0_26, %c0_27] : memref<2x32xf32, #tpu.memory_space<vmem>>, vector<2x32xf32>
      %52 = arith.maximumf %51, %50 : vector<2x32xf32>
      %c0_28 = arith.constant 0 : index
      %c0_29 = arith.constant 0 : index
      %53 = vector.load %arg6[%c0_28, %c0_29] : memref<2x32xf32, #tpu.memory_space<vmem>>, vector<2x32xf32>
      tpu.vector_store %arg6[%c0_28, %c0_29], %52 {strides = array<i32>} : memref<2x32xf32, #tpu.memory_space<vmem>>, vector<2x32xf32>,
    }
    %c6_i32_7 = arith.constant 6 : i32
    return
  }
  func.func @transform_0(%arg0: i32, %arg1: memref<6xi32, #tpu.memory_space<smem>>) -> (i32, i32, i32) {
    %c0_i32 = arith.constant 0 : i32
    %c0_i32_0 = arith.constant 0 : i32
    %c0_i32_1 = arith.constant 0 : i32
    %c0_i32_2 = arith.constant 0 : i32
    return %c0_i32, %c0_i32_0, %c0_i32_1 : i32, i32, i32
  }
  func.func @transform_1(%arg0: i32, %arg1: memref<6xi32, #tpu.memory_space<smem>>) -> (i32, i32, i32) {
    %c0_i32 = arith.constant 0 : i32
    %c0_i32_0 = arith.constant 0 : i32
    %c0_i32_1 = arith.constant 0 : i32
    %c0_i32_2 = arith.constant 0 : i32
    return %c0_i32, %c0_i32_0, %c0_i32_1 : i32, i32, i32
  }
  func.func @transform_2(%arg0: i32, %arg1: memref<6xi32, #tpu.memory_space<smem>>) -> (i32, i32, i32) {
    %c0_i32 = arith.constant 0 : i32
    %c0_i32_0 = arith.constant 0 : i32
    %c0_i32_1 = arith.constant 0 : i32
    %c0_i32_2 = arith.constant 0 : i32
    return %c0_i32, %c0_i32_0, %c0_i32_1 : i32, i32, i32
  }
  func.func @transform_3(%arg0: i32, %arg1: memref<6xi32, #tpu.memory_space<smem>>) -> (i32, i32) {
    %c0_i32 = arith.constant 0 : i32
    %c0_i32_0 = arith.constant 0 : i32
    %c0_i32_1 = arith.constant 0 : i32
    return %c0_i32, %c0_i32_0 : i32, i32
  }
  func.func @transform_4(%arg0: i32, %arg1: memref<6xi32, #tpu.memory_space<smem>>) -> (i32, i32) {
    %c0_i32 = arith.constant 0 : i32
    %c0_i32_0 = arith.constant 0 : i32
    %c0_i32_1 = arith.constant 0 : i32
    return %c0_i32, %c0_i32_0 : i32, i32
  }
}

</mosaic_0001>

<llo_original>
// kernel: tpu_custom_call.1
$region0: #{tpu_custom_call.1}
  #allocation0 [shape = 'u32[]', space=smem, size = 0x4, offset = 0x4, fixed_abs, tag = 'smem constant byte address 0x4 - core index']
  #allocation1 [shape = 'u32[144,128]{1,0:T(1,128)}', space=vmem, size = 0x12000, scoped, tag = 'internal scratch']
  #allocation2 [shape = 'f32[3,8,32]{2,1,0:T(8,128)}', space=vmem, size = 0x3000, scoped, tag = 'scratch operand']
  #allocation3 [shape = 's32[1]{0}', space=sflag, size = 0x4, scoped, tag = 'scoped memory for tpu_custom_call.1']
  #allocation4 [shape = 'u8[512]{0}', space=smem, size = 0x200, scoped, tag = 'prefetched SMEM operand 0']
  %s0 = inlined_call_operand.vmem [shape: s32[6], index: 0, kind: input, shape index: {}]
  %s1 = inlined_call_operand.vmem [shape: s32[6,8,1], index: 1, kind: input, shape index: {}]
  %s2 = inlined_call_operand.vmem [shape: s32[6,1,8], index: 2, kind: input, shape index: {}]
  %s3 = inlined_call_operand.vmem [shape: s32[6,1,8], index: 3, kind: input, shape index: {}]
  %s4 = inlined_call_operand.vmem [shape: f32[17,32], index: 4, kind: input, shape index: {}]
  %s5 = inlined_call_operand.hbm [shape: f32[2,32], index: 5, kind: output, shape index: {}]
  %s6 = sld [smem:[#allocation0]]
  $region37: #{tpu_custom_call.1} parent=0
    _
  %s8 = ssub.s32 1, %s6
  %s9 = scalar_select 0, %s8, %s6
  %s10 = sshll.u32 %s0, 4
  %s11 = int_to_ptr.vmem [resolvable:$true] %s10
  %13 = dma.vmem_to_smem %s11, 16, [#allocation4], [#allocation3]
  %14 = dma.done [#allocation3], 16
  %15 = sfence
  $region1: #{tpu_custom_call.1} parent=0
    #allocation5 [shape = 'u8[1024]{0}', space=vmem, size = 0x400, scoped, tag = 'output window, operand 0, single buffered']
    #allocation6 [shape = 's32[1]{0}', space=sflag, size = 0x4, scoped, tag = 'scoped memory for tpu_custom_call.1']
    %16 = vsyncpa [#allocation6], 0
    // Predicated region
    $region2: #{tpu_custom_call.1} parent=1 // pred_check
      _
    $region3: #{tpu_custom_call.1} parent=1 // pred_check_branch
      %18 = sbr.rel (0) target = $region5
    $region4: #{tpu_custom_call.1} parent=1 // pred_region
      _
    $region5: #{tpu_custom_call.1} parent=1 // pred_fallthru
      _
    // Predicated region
    $region6: #{tpu_custom_call.1} parent=1 // pred_check
      _
    $region7: #{tpu_custom_call.1} parent=1 // pred_check_branch
      %20 = sbr.rel (0) target = $region9
    $region8: #{tpu_custom_call.1} parent=1 // pred_region
      _
    $region9: #{tpu_custom_call.1} parent=1 // pred_fallthru
      _
    // Predicated region
    $region10: #{tpu_custom_call.1} parent=1 // pred_check
      _
    $region11: #{tpu_custom_call.1} parent=1 // pred_check_branch
      %22 = sbr.rel (0) target = $region13
    $region12: #{tpu_custom_call.1} parent=1 // pred_region
      _
    $region13: #{tpu_custom_call.1} parent=1 // pred_fallthru
      _
    // Predicated region
    $region14: #{tpu_custom_call.1} parent=1 // pred_check
      _
    $region15: #{tpu_custom_call.1} parent=1 // pred_check_branch
      %24 = sbr.rel (0) target = $region17
    $region16: #{tpu_custom_call.1} parent=1 // pred_region
      _
    $region17: #{tpu_custom_call.1} parent=1 // pred_fallthru
      _
    %vm25 = vcmask 261120
    %26 = vst.msk [vmem:[#allocation2] sm:$0xff] %vm25, 0.0
    %27 = vst.msk [vmem:[#allocation2 + $0x8] sm:$0xff] %vm25, 0.0
    %28 = vst.msk [vmem:[#allocation2 + $0x10] sm:$0xff] %vm25, 0.0
    %vm29 = vcmask 254976
    %30 = vst.msk [vmem:[#allocation5] sm:$0x3] %vm29, -inf
    %v31 = vlaneseq
    %v32 = vand.u32 %v31, 127
    %v33 = vlaneseq
    %v34 = vshrl.u32 %v33, 7
    %v35 = vld [vmem:[%s4] sm:$0xff]
    %v36 = vld [vmem:[%s4 + $0x8] sm:$0xff]
    %v37 = vld [vmem:[%s4 + $0x10] sm:$0x1]
    loop: start=0, step=1, limit=6
    $region18: #{tpu_custom_call.1} parent=1 // loop_pre_header
      _
    $region19: #{tpu_custom_call.1} parent=1 // loop_header
      %s39 = sphi 0, %s43
      %p40 = scmp.ge.s32.totalorder %s39, 6
    $region20: #{tpu_custom_call.1} parent=1 // loop_header_branch
      %42 = sbr.rel (%p40) target = $region24
    $region21: #{tpu_custom_call.1} parent=1 // loop_body
      %s44 = smul.u32 %s39, 8
      %s45 = scalar_lea.vmem %s1, %s44
      %v46 = vld [vmem:[%s45] sm:$0xff]
      %s47 = scalar_lea.vmem %s2, %s39
      %v48 = vld [vmem:[%s47] sm:$0x1]
      %s49 = scalar_lea.vmem %s3, %s39
      %v50 = vld [vmem:[%s49] sm:$0x1]
      %s51 = sld [smem:[#allocation4 + %s39]]
      %vm52 = vcmp.ge.s32.totalorder %v46, 0
      %53 = vset.pattern.permute.xlu0 0
      %54 = vperm.xlu0 %53, %v46
      %v55 = vpop.permute.xlu0 %54
      %vm56 = vcmp.eq.s32.totalorder %v32, %v55
      %vm57 = vcmp.eq.s32.totalorder %v32, 16
      %v58 = vsel %vm52, 1, 0
      %59 = vset.pattern.permute.xlu0 0
      %60 = vperm.xlu0 %59, %v58
      %v61 = vpop.permute.xlu0 %60
      %vm62 = vcmp.eq.s32.totalorder %v61, 1
      %vm63 = vmand %vm57, %vm62
      %vm64 = vmor %vm56, %vm63
      %v65 = vsel %vm64, 1, 0
      %v66 = vcvt.s32.f32 %v65
      %s67 = smul.u32 %s51, 8
      %s68 = scalar_lea.vmem [#allocation2], %s67
      %v69 = vld [vmem:[%s68] sm:$0xff]
      %70 = vst.msk [vmem:[%s68] sm:$0xff] %vm25, 0.0
      %vm71 = vcmask 138240
      %v73 = vsel %vm71, %v66, 0
      %vm75 = vcmask 1040384
      %v77 = vsel %vm75, %v37, 0
      %79 = vmatprep.subr.mxu0 0.0
      %80 = vmatpush1.msra.mxu0 %v35
      %81 = vmatprep.subr.mxu0 0.0
      %82 = vmatpush1.msra.mxu0 %v36
      %83 = vmatprep.subr.mxu0 0.0
      %84 = vmatpush1.msra.mxu0 %v77
      %85 = vmatprep.subr.mxu0 0.0
      %86 = vmatpush1.msra.mxu0 0.0
      %87 = vmatprep.subr.mxu0 0.0
      %88 = vmatpush1.msra.mxu0 0.0
      %89 = vmatprep.subr.mxu0 0.0
      %90 = vmatpush1.msra.mxu0 0.0
      %91 = vmatprep.subr.mxu0 0.0
      %92 = vmatpush1.msra.mxu0 0.0
      %93 = vmatprep.subr.mxu0 0.0
      %94 = vmatpush1.msra.mxu0 0.0
      %95 = vmatprep.subr.mxu0 0.0
      %96 = vmatpush1.msra.mxu0 0.0
      %97 = vmatprep.subr.mxu0 0.0
      %98 = vmatpush1.msra.mxu0 0.0
      %99 = vmatprep.subr.mxu0 0.0
      %100 = vmatpush1.msra.mxu0 0.0
      %101 = vmatprep.subr.mxu0 0.0
      %102 = vmatpush1.msra.mxu0 0.0
      %103 = vmatprep.subr.mxu0 0.0
      %104 = vmatpush1.msra.mxu0 0.0
      %105 = vmatprep.subr.mxu0 0.0
      %106 = vmatpush1.msra.mxu0 0.0
      %107 = vmatprep.subr.mxu0 0.0
      %108 = vmatpush1.msra.mxu0 0.0
      %109 = vmatprep.subr.mxu0 0.0
      %110 = vmatpush1.msra.mxu0 0.0
      %111 = vmatprep.subr.mxu0 0.0
      %112 = vmatpush1.msra.mxu0 0.0
      %113 = vmatprep.subr.mxu0 0.0
      %114 = vmatpush1.msra.mxu0 0.0
      %115 = vmatprep.subr.mxu0 0.0
      %116 = vmatpush1.msra.mxu0 0.0
      %117 = vmatprep.subr.mxu0 0.0
      %118 = vmatpush1.msra.mxu0 0.0
      %119 = vmatprep.subr.mxu0 0.0
      %120 = vmatpush1.msra.mxu0 0.0
      %121 = vmatprep.subr.mxu0 0.0
      %122 = vmatpush1.msra.mxu0 0.0
      %123 = vmatprep.subr.mxu0 0.0
      %124 = vmatpush1.msra.mxu0 0.0
      %125 = vmatprep.subr.mxu0 0.0
      %126 = vmatpush1.msra.mxu0 0.0
      %127 = vmatprep.subr.mxu0 0.0
      %128 = vmatpush1.msra.mxu0 0.0
      %129 = vmatprep.subr.mxu0 0.0
      %130 = vmatpush1.msra.mxu0 0.0
      %131 = vmatprep.subr.mxu0 0.0
      %132 = vmatpush1.msra.mxu0 0.0
      %133 = vmatprep.subr.mxu0 0.0
      %134 = vmatpush1.msra.mxu0 0.0
      %135 = vmatprep.subr.mxu0 0.0
      %136 = vmatpush1.msra.mxu0 0.0
      %137 = vmatprep.subr.mxu0 0.0
      %138 = vmatpush1.msra.mxu0 0.0
      %139 = vmatprep.subr.mxu0 0.0
      %140 = vmatpush1.msra.mxu0 0.0
      %141 = vmatprep.subr.mxu0 0.0
      %142 = vmatpush1.msra.mxu0 0.0
      %143 = vmatprep.mubr.f32.mxu0 0.0
      %144 = vmatmul.mubr.f32.gmra.mrb[0].mxu0 %v73
      %v145 = vpop.f32.mrb[0].mxu0
      %v146 = vadd.f32 0.0, %v145
      %v147 = vpop.f32.mrb[0].mxu0
      %148 = vdwg.mxu0
      %v149 = vadd.f32 %v69, %v146
      %p150 = scmp.gt.s32.totalorder %s51, 0
      // Predicated region
      $region25: #{tpu_custom_call.1} parent=21 // pred_check
        %p151 = pneg %p150
      $region26: #{tpu_custom_call.1} parent=21 // pred_check_branch
        %153 = sbr.rel (%p151) target = $region28
      $region27: #{tpu_custom_call.1} parent=21 // pred_region
        %v154 = vlaneseq
        %v155 = vshrl.u32 %v154, 7
        %v156 = vsub.s32 0, %v155
        %v157 = vrot.slane %v48, %v156
        %vm158 = vcmp.eq.s32.totalorder %v34, %v157
        %v159 = vsel %vm158, 1, 0
        %v160 = vcvt.s32.f32 %v159
        %s161 = ssub.s32 %s51, 1
        %s162 = smul.u32 %s161, 8
        %s163 = scalar_lea.vmem [#allocation2], %s162
        %v164 = vld [vmem:[%s163] sm:$0xff]
        %vm165 = vcmask 64512
        %v167 = vsel %vm165, %v160, 0
        %169 = vmatprep.subr.mxu0 0.0
        %170 = vmatpush1.msra.mxu0 %v149
        %171 = vmatprep.subr.mxu0 0.0
        %172 = vmatpush1.msra.mxu0 0.0
        %173 = vmatprep.subr.mxu0 0.0
        %174 = vmatpush1.msra.mxu0 0.0
        %175 = vmatprep.subr.mxu0 0.0
        %176 = vmatpush1.msra.mxu0 0.0
        %177 = vmatprep.subr.mxu0 0.0
        %178 = vmatpush1.msra.mxu0 0.0
        %179 = vmatprep.subr.mxu0 0.0
        %180 = vmatpush1.msra.mxu0 0.0
        %181 = vmatprep.subr.mxu0 0.0
        %182 = vmatpush1.msra.mxu0 0.0
        %183 = vmatprep.subr.mxu0 0.0
        %184 = vmatpush1.msra.mxu0 0.0
        %185 = vmatprep.subr.mxu0 0.0
        %186 = vmatpush1.msra.mxu0 0.0
        %187 = vmatprep.subr.mxu0 0.0
        %188 = vmatpush1.msra.mxu0 0.0
        %189 = vmatprep.subr.mxu0 0.0
        %190 = vmatpush1.msra.mxu0 0.0
        %191 = vmatprep.subr.mxu0 0.0
        %192 = vmatpush1.msra.mxu0 0.0
        %193 = vmatprep.subr.mxu0 0.0
        %194 = vmatpush1.msra.mxu0 0.0
        %195 = vmatprep.subr.mxu0 0.0
        %196 = vmatpush1.msra.mxu0 0.0
        %197 = vmatprep.subr.mxu0 0.0
        %198 = vmatpush1.msra.mxu0 0.0
        %199 = vmatprep.subr.mxu0 0.0
        %200 = vmatpush1.msra.mxu0 0.0
        %201 = vmatprep.subr.mxu0 0.0
        %202 = vmatpush1.msra.mxu0 0.0
        %203 = vmatprep.subr.mxu0 0.0
        %204 = vmatpush1.msra.mxu0 0.0
        %205 = vmatprep.subr.mxu0 0.0
        %206 = vmatpush1.msra.mxu0 0.0
        %207 = vmatprep.subr.mxu0 0.0
        %208 = vmatpush1.msra.mxu0 0.0
        %209 = vmatprep.subr.mxu0 0.0
        %210 = vmatpush1.msra.mxu0 0.0
        %211 = vmatprep.subr.mxu0 0.0
        %212 = vmatpush1.msra.mxu0 0.0
        %213 = vmatprep.subr.mxu0 0.0
        %214 = vmatpush1.msra.mxu0 0.0
        %215 = vmatprep.subr.mxu0 0.0
        %216 = vmatpush1.msra.mxu0 0.0
        %217 = vmatprep.subr.mxu0 0.0
        %218 = vmatpush1.msra.mxu0 0.0
        %219 = vmatprep.subr.mxu0 0.0
        %220 = vmatpush1.msra.mxu0 0.0
        %221 = vmatprep.subr.mxu0 0.0
        %222 = vmatpush1.msra.mxu0 0.0
        %223 = vmatprep.subr.mxu0 0.0
        %224 = vmatpush1.msra.mxu0 0.0
        %225 = vmatprep.subr.mxu0 0.0
        %226 = vmatpush1.msra.mxu0 0.0
        %227 = vmatprep.subr.mxu0 0.0
        %228 = vmatpush1.msra.mxu0 0.0
        %229 = vmatprep.subr.mxu0 0.0
        %230 = vmatpush1.msra.mxu0 0.0
        %231 = vmatprep.subr.mxu0 0.0
        %232 = vmatpush1.msra.mxu0 0.0
        %233 = vmatprep.mubr.f32.mxu0 0.0
        %234 = vmatmul.mubr.f32.gmra.mrb[0].mxu0 %v167
        %v235 = vpop.f32.mrb[0].mxu0
        %v236 = vadd.f32 0.0, %v235
        %v237 = vpop.f32.mrb[0].mxu0
        %238 = vdwg.mxu0
        %v239 = vadd.f32 %v164, %v236
        %240 = vst.msk [vmem:[%s163] sm:$0xff] %vm25, %v239
      $region28: #{tpu_custom_call.1} parent=21 // pred_fallthru
        _
      %v241 = vlaneseq
      %v242 = vshrl.u32 %v241, 7
      %v243 = vsub.s32 0, %v242
      %v244 = vrot.slane %v50, %v243
      %vm245 = vcmp.eq.s32.totalorder %v34, %v244
      %v246 = vsel %vm245, 1, 0
      %v247 = vcvt.s32.f32 %v246
      %vm248 = vcmask 64512
      %v250 = vsel %vm248, %v247, 0
      %252 = vmatprep.subr.mxu0 0.0
      %253 = vmatpush1.msra.mxu0 %v149
      %254 = vmatprep.subr.mxu0 0.0
      %255 = vmatpush1.msra.mxu0 0.0
      %256 = vmatprep.subr.mxu0 0.0
      %257 = vmatpush1.msra.mxu0 0.0
      %258 = vmatprep.subr.mxu0 0.0
      %259 = vmatpush1.msra.mxu0 0.0
      %260 = vmatprep.subr.mxu0 0.0
      %261 = vmatpush1.msra.mxu0 0.0
      %262 = vmatprep.subr.mxu0 0.0
      %263 = vmatpush1.msra.mxu0 0.0
      %264 = vmatprep.subr.mxu0 0.0
      %265 = vmatpush1.msra.mxu0 0.0
      %266 = vmatprep.subr.mxu0 0.0
      %267 = vmatpush1.msra.mxu0 0.0
      %268 = vmatprep.subr.mxu0 0.0
      %269 = vmatpush1.msra.mxu0 0.0
      %270 = vmatprep.subr.mxu0 0.0
      %271 = vmatpush1.msra.mxu0 0.0
      %272 = vmatprep.subr.mxu0 0.0
      %273 = vmatpush1.msra.mxu0 0.0
      %274 = vmatprep.subr.mxu0 0.0
      %275 = vmatpush1.msra.mxu0 0.0
      %276 = vmatprep.subr.mxu0 0.0
      %277 = vmatpush1.msra.mxu0 0.0
      %278 = vmatprep.subr.mxu0 0.0
      %279 = vmatpush1.msra.mxu0 0.0
      %280 = vmatprep.subr.mxu0 0.0
      %281 = vmatpush1.msra.mxu0 0.0
      %282 = vmatprep.subr.mxu0 0.0
      %283 = vmatpush1.msra.mxu0 0.0
      %284 = vmatprep.subr.mxu0 0.0
      %285 = vmatpush1.msra.mxu0 0.0
      %286 = vmatprep.subr.mxu0 0.0
      %287 = vmatpush1.msra.mxu0 0.0
      %288 = vmatprep.subr.mxu0 0.0
      %289 = vmatpush1.msra.mxu0 0.0
      %290 = vmatprep.subr.mxu0 0.0
      %291 = vmatpush1.msra.mxu0 0.0
      %292 = vmatprep.subr.mxu0 0.0
      %293 = vmatpush1.msra.mxu0 0.0
      %294 = vmatprep.subr.mxu0 0.0
      %295 = vmatpush1.msra.mxu0 0.0
      %296 = vmatprep.subr.mxu0 0.0
      %297 = vmatpush1.msra.mxu0 0.0
      %298 = vmatprep.subr.mxu0 0.0
      %299 = vmatpush1.msra.mxu0 0.0
      %300 = vmatprep.subr.mxu0 0.0
      %301 = vmatpush1.msra.mxu0 0.0
      %302 = vmatprep.subr.mxu0 0.0
      %303 = vmatpush1.msra.mxu0 0.0
      %304 = vmatprep.subr.mxu0 0.0
      %305 = vmatpush1.msra.mxu0 0.0
      %306 = vmatprep.subr.mxu0 0.0
      %307 = vmatpush1.msra.mxu0 0.0
      %308 = vmatprep.subr.mxu0 0.0
      %309 = vmatpush1.msra.mxu0 0.0
      %310 = vmatprep.subr.mxu0 0.0
      %311 = vmatpush1.msra.mxu0 0.0
      %312 = vmatprep.subr.mxu0 0.0
      %313 = vmatpush1.msra.mxu0 0.0
      %314 = vmatprep.subr.mxu0 0.0
      %315 = vmatpush1.msra.mxu0 0.0
      %316 = vmatprep.mubr.f32.mxu0 0.0
      %317 = vmatmul.mubr.f32.gmra.mrb[0].mxu0 %v250
      %v318 = vpop.f32.mrb[0].mxu0
      %v319 = vadd.f32 0.0, %v318
      %v320 = vpop.f32.mrb[0].mxu0
      %321 = vdwg.mxu0
      %v322 = vld [vmem:[#allocation5] sm:$0x3]
      %v323 = vmax.f32 %v322, %v319
      %324 = vst.msk [vmem:[#allocation5] sm:$0x3] %vm29, %v323
    $region22: #{tpu_custom_call.1} parent=1 // loop_footer
      %s43 = sadd.s32 1, %s39
    $region23: #{tpu_custom_call.1} parent=1 // loop_footer_branch
      %38 = sbr.rel target = $region19
    $region24: #{tpu_custom_call.1} parent=1 // loop_exit
      _
    // Predicated region
    $region29: #{tpu_custom_call.1} parent=1 // pred_check
      _
    $region30: #{tpu_custom_call.1} parent=1 // pred_check_branch
      %326 = sbr.rel (0) target = $region32
    $region31: #{tpu_custom_call.1} parent=1 // pred_region
      %s328 = ssub.s32 32, 32
      %329 = vsyncadd [#allocation6], %s328
      %s331 = sshll.u32 [#allocation5], 4
      %s332 = int_to_ptr.vmem [resolvable:$true] %s331
      %334 = dma.vmem_to_hbm [thread:$0]  %s332, 32, %s5, [#allocation6]
    $region32: #{tpu_custom_call.1} parent=1 // pred_fallthru
      _
    // Predicated region
    $region33: #{tpu_custom_call.1} parent=1 // pred_check
      _
    $region34: #{tpu_custom_call.1} parent=1 // pred_check_branch
      %336 = sbr.rel (0) target = $region36
    $region35: #{tpu_custom_call.1} parent=1 // pred_region
      %337 = dma.done [#allocation6], 32
    $region36: #{tpu_custom_call.1} parent=1 // pred_fallthru
      _
    %338 = vsyncpa [#allocation6], 1

</llo_original>
